<compile_context>
chip_gen: v7x
topology: tpu7x:2x2x1
jax: 0.10.0
libtpu: 0.0.40
codegen_flags: <defaults>
</compile_context>

<pallas_src>
import jax
import jax.numpy as jnp
from jax.experimental import pallas as pl
from jax.experimental.pallas import tpu as pltpu


def _round_up(x, m):
    return ((x + m - 1) // m) * m


def qnetwork_kernel(xt_ref, w1_ref, b1_ref, w2_ref, b2_ref, w3_ref, b3_ref, o_ref):
    # xt_ref: (dim, tile_b) — batch on the lane axis.
    xt = xt_ref[...]
    # fc1 + relu: (H, dim) @ (dim, tile_b) -> (H, tile_b), f32 accumulation on MXU.
    h = jnp.dot(w1_ref[...], xt, preferred_element_type=jnp.float32)
    h = jnp.maximum(h + b1_ref[...], 0.0)                     # bias/ReLU in f32 (VPU)
    # fc2 + relu
    h = jnp.dot(w2_ref[...], h.astype(w2_ref.dtype), preferred_element_type=jnp.float32)
    h = jnp.maximum(h + b2_ref[...], 0.0)
    # fc3 (no activation) -> (1, tile_b): lane-dense store.
    o_ref[...] = (
        jnp.dot(w3_ref[...], h.astype(w3_ref.dtype), preferred_element_type=jnp.float32)
        + b3_ref[...]
    )


def qnetwork_forward(x, params, *, tile_b=None, max_tile_b=1024):
    """x: (B, dim) float32 -> (B, 1) float32. Weights in PyTorch (out, in) layout."""
    w1, b1, w2, b2, w3, b3 = params
    B, dim = x.shape
    H = w1.shape[0]            # 128
    O = w3.shape[0]            # 1
    cdt = w1.dtype             # MXU input dtype (bf16 by default)

    # Lane-aligned batch tile: multiple of 128, capped so VMEM stays bounded.
    if tile_b is None:
        tile_b = min(max_tile_b, _round_up(B, 128))
    tile_b = max(128, _round_up(tile_b, 128))
    Bp = _round_up(B, tile_b)
    grid = (Bp // tile_b,)

    # Feature-major (transposed) input so the batch sits on the lane axis; pad B.
    xt = jnp.pad(x.T.astype(cdt), ((0, 0), (0, Bp - B)))

    out = pl.pallas_call(
        qnetwork_kernel,
        out_shape=jax.ShapeDtypeStruct((O, Bp), jnp.float32),
        grid_spec=pltpu.PrefetchScalarGridSpec(
            num_scalar_prefetch=0,
            grid=grid,
            in_specs=[
                pl.BlockSpec((dim, tile_b), lambda i: (0, i)),   # x^T tile
                pl.BlockSpec((H, dim), lambda i: (0, 0)),        # W1 (out, in)
                pl.BlockSpec((H, 1), lambda i: (0, 0)),          # b1 column (f32)
                pl.BlockSpec((H, H), lambda i: (0, 0)),          # W2
                pl.BlockSpec((H, 1), lambda i: (0, 0)),          # b2
                pl.BlockSpec((O, H), lambda i: (0, 0)),          # W3
                pl.BlockSpec((O, 1), lambda i: (0, 0)),          # b3
            ],
            out_specs=pl.BlockSpec((O, tile_b), lambda i: (0, i)),
        ),
        compiler_params=pltpu.CompilerParams(
            dimension_semantics=("parallel",),
        ),
    )(xt, w1, b1, w2, b2, w3, b3)

    return out[0, :B].reshape(B, 1)


def init_qnetwork_params(key, dim, hidden=128, out=1, dtype=jnp.bfloat16):
    """nn.Linear-style init: U(-1/sqrt(fan_in), 1/sqrt(fan_in)).
    Weights: PyTorch layout (out_features, in_features) cast to `dtype`.
    Biases:  (out_features, 1) float32 columns (broadcast along the lane axis)."""
    keys = jax.random.split(key, 6)

    def lin(kw, kb, fan_in, fan_out):
        bound = 1.0 / jnp.sqrt(jnp.float32(fan_in))
        w = jax.random.uniform(kw, (fan_out, fan_in), jnp.float32, -bound, bound)
        b = jax.random.uniform(kb, (fan_out, 1), jnp.float32, -bound, bound)
        return w.astype(dtype), b

    w1, b1 = lin(keys[0], keys[1], dim, hidden)
    w2, b2 = lin(keys[2], keys[3], hidden, hidden)
    w3, b3 = lin(keys[4], keys[5], hidden, out)
    return (w1, b1, w2, b2, w3, b3)


def qnetwork_reference(x, params):
    """Pure-JAX reference with the same bf16-input / f32-accumulation recipe."""
    w1, b1, w2, b2, w3, b3 = params
    h = x.astype(w1.dtype)
    h = jnp.maximum(jnp.dot(h, w1.T, preferred_element_type=jnp.float32) + b1.T, 0.0)
    h = jnp.maximum(
        jnp.dot(h.astype(w2.dtype), w2.T, preferred_element_type=jnp.float32) + b2.T, 0.0)
    return jnp.dot(h.astype(w3.dtype), w3.T, preferred_element_type=jnp.float32) + b3.T


if __name__ == "__main__":
    key = jax.random.PRNGKey(0)
    k_x, k_p = jax.random.split(key)

    B, dim = 200, 16                     # ragged batch: pads to 256 -> grid of 2 tiles
    x = jax.random.normal(k_x, (B, dim), jnp.float32)
    params = init_qnetwork_params(k_p, dim)

    out = qnetwork_forward(x, params, tile_b=128)
    out = jax.block_until_ready(out)

    ref = qnetwork_reference(x, params)
    assert out.shape == (B, 1)
    err = jnp.max(jnp.abs(out - ref))
    assert jnp.allclose(out, ref, atol=1e-4, rtol=1e-4), f"mismatch vs reference: {err}"

    print("KERNEL_OK")
</pallas_src>

<mosaic_0001>
module attributes {stable_mosaic.version = 11 : i64} {
  func.func @qnetwork_kernel(%arg0: i32, %arg1: memref<16x128xbf16, #tpu.memory_space<vmem>>, %arg2: memref<128x16xbf16, #tpu.memory_space<vmem>>, %arg3: memref<128x1xf32, #tpu.memory_space<vmem>>, %arg4: memref<128x128xbf16, #tpu.memory_space<vmem>>, %arg5: memref<128x1xf32, #tpu.memory_space<vmem>>, %arg6: memref<1x128xbf16, #tpu.memory_space<vmem>>, %arg7: memref<1x1xf32, #tpu.memory_space<vmem>>, %arg8: memref<1x128xf32, #tpu.memory_space<vmem>>) attributes {dimension_semantics = [#tpu.dimension_semantics<parallel>], iteration_bounds = array<i64: 2>, scalar_prefetch = 0 : i64, scratch_operands = 0 : i64, tpu.core_type = #tpu.core_type<tc>, window_params = [{transform_indices = @transform_0, window_bounds = array<i64: 16, 128>}, {pipeline_mode = #tpu.pipeline_mode<synchronous>, transform_indices = @transform_1, window_bounds = array<i64: 128, 16>}, {pipeline_mode = #tpu.pipeline_mode<synchronous>, transform_indices = @transform_2, window_bounds = array<i64: 128, 1>}, {pipeline_mode = #tpu.pipeline_mode<synchronous>, transform_indices = @transform_3, window_bounds = array<i64: 128, 128>}, {pipeline_mode = #tpu.pipeline_mode<synchronous>, transform_indices = @transform_4, window_bounds = array<i64: 128, 1>}, {pipeline_mode = #tpu.pipeline_mode<synchronous>, transform_indices = @transform_5, window_bounds = array<i64: 1, 128>}, {pipeline_mode = #tpu.pipeline_mode<synchronous>, transform_indices = @transform_6, window_bounds = array<i64: 1, 1>}, {transform_indices = @transform_7, window_bounds = array<i64: 1, 128>}]} {
    %c0 = arith.constant 0 : index
    %c0_0 = arith.constant 0 : index
    %0 = vector.load %arg1[%c0, %c0_0] : memref<16x128xbf16, #tpu.memory_space<vmem>>, vector<16x128xbf16>
    %c0_1 = arith.constant 0 : index
    %c0_2 = arith.constant 0 : index
    %1 = vector.load %arg2[%c0_1, %c0_2] : memref<128x16xbf16, #tpu.memory_space<vmem>>, vector<128x16xbf16>
    %cst = arith.constant dense<0.000000e+00> : vector<128x128xf32>
    %2 = tpu.matmul %1, %0, %cst {dimension_numbers = #tpu.dot_dimension_numbers<[1], [0], [0], [1], [0, 0, 1, 1], [], []>} : vector<128x16xbf16>, vector<16x128xbf16>, vector<128x128xf32> -> vector<128x128xf32>
    %c0_3 = arith.constant 0 : index
    %c0_4 = arith.constant 0 : index
    %3 = vector.load %arg3[%c0_3, %c0_4] : memref<128x1xf32, #tpu.memory_space<vmem>>, vector<128x1xf32>
    %4 = vector.broadcast %3 : vector<128x1xf32> to vector<128x128xf32>
    %5 = arith.addf %2, %4 : vector<128x128xf32>
    %cst_5 = arith.constant 0.000000e+00 : f32
    %6 = vector.broadcast %cst_5 : f32 to vector<128x128xf32>
    %7 = arith.maximumf %5, %6 : vector<128x128xf32>
    %c0_6 = arith.constant 0 : index
    %c0_7 = arith.constant 0 : index
    %8 = vector.load %arg4[%c0_6, %c0_7] : memref<128x128xbf16, #tpu.memory_space<vmem>>, vector<128x128xbf16>
    %9 = arith.truncf %7 : vector<128x128xf32> to vector<128x128xbf16>
    %cst_8 = arith.constant dense<0.000000e+00> : vector<128x128xf32>
    %10 = tpu.matmul %8, %9, %cst_8 {dimension_numbers = #tpu.dot_dimension_numbers<[1], [0], [0], [1], [0, 0, 1, 1], [], []>} : vector<128x128xbf16>, vector<128x128xbf16>, vector<128x128xf32> -> vector<128x128xf32>
    %c0_9 = arith.constant 0 : index
    %c0_10 = arith.constant 0 : index
    %11 = vector.load %arg5[%c0_9, %c0_10] : memref<128x1xf32, #tpu.memory_space<vmem>>, vector<128x1xf32>
    %12 = vector.broadcast %11 : vector<128x1xf32> to vector<128x128xf32>
    %13 = arith.addf %10, %12 : vector<128x128xf32>
    %cst_11 = arith.constant 0.000000e+00 : f32
    %14 = vector.broadcast %cst_11 : f32 to vector<128x128xf32>
    %15 = arith.maximumf %13, %14 : vector<128x128xf32>
    %c0_12 = arith.constant 0 : index
    %c0_13 = arith.constant 0 : index
    %16 = vector.load %arg6[%c0_12, %c0_13] : memref<1x128xbf16, #tpu.memory_space<vmem>>, vector<1x128xbf16>
    %17 = arith.truncf %15 : vector<128x128xf32> to vector<128x128xbf16>
    %cst_14 = arith.constant dense<0.000000e+00> : vector<1x128xf32>
    %18 = tpu.matmul %16, %17, %cst_14 {dimension_numbers = #tpu.dot_dimension_numbers<[1], [0], [0], [1], [0, 0, 1, 1], [], []>} : vector<1x128xbf16>, vector<128x128xbf16>, vector<1x128xf32> -> vector<1x128xf32>
    %c0_15 = arith.constant 0 : index
    %c0_16 = arith.constant 0 : index
    %19 = vector.load %arg7[%c0_15, %c0_16] : memref<1x1xf32, #tpu.memory_space<vmem>>, vector<1x1xf32>
    %20 = vector.broadcast %19 : vector<1x1xf32> to vector<1x128xf32>
    %21 = arith.addf %18, %20 : vector<1x128xf32>
    %c0_17 = arith.constant 0 : index
    %c0_18 = arith.constant 0 : index
    %22 = vector.load %arg8[%c0_17, %c0_18] : memref<1x128xf32, #tpu.memory_space<vmem>>, vector<1x128xf32>
    tpu.vector_store %arg8[%c0_17, %c0_18], %21 {strides = array<i32>} : memref<1x128xf32, #tpu.memory_space<vmem>>, vector<1x128xf32>,
    return
  }
  func.func @transform_0(%arg0: i32) -> (i32, i32) {
    %c0_i32 = arith.constant 0 : i32
    %c0_i32_0 = arith.constant 0 : i32
    return %c0_i32, %arg0 : i32, i32
  }
  func.func @transform_1(%arg0: i32) -> (i32, i32) {
    %c0_i32 = arith.constant 0 : i32
    %c0_i32_0 = arith.constant 0 : i32
    %c0_i32_1 = arith.constant 0 : i32
    return %c0_i32, %c0_i32_0 : i32, i32
  }
  func.func @transform_2(%arg0: i32) -> (i32, i32) {
    %c0_i32 = arith.constant 0 : i32
    %c0_i32_0 = arith.constant 0 : i32
    %c0_i32_1 = arith.constant 0 : i32
    return %c0_i32, %c0_i32_0 : i32, i32
  }
  func.func @transform_3(%arg0: i32) -> (i32, i32) {
    %c0_i32 = arith.constant 0 : i32
    %c0_i32_0 = arith.constant 0 : i32
    %c0_i32_1 = arith.constant 0 : i32
    return %c0_i32, %c0_i32_0 : i32, i32
  }
  func.func @transform_4(%arg0: i32) -> (i32, i32) {
    %c0_i32 = arith.constant 0 : i32
    %c0_i32_0 = arith.constant 0 : i32
    %c0_i32_1 = arith.constant 0 : i32
    return %c0_i32, %c0_i32_0 : i32, i32
  }
  func.func @transform_5(%arg0: i32) -> (i32, i32) {
    %c0_i32 = arith.constant 0 : i32
    %c0_i32_0 = arith.constant 0 : i32
    %c0_i32_1 = arith.constant 0 : i32
    return %c0_i32, %c0_i32_0 : i32, i32
  }
  func.func @transform_6(%arg0: i32) -> (i32, i32) {
    %c0_i32 = arith.constant 0 : i32
    %c0_i32_0 = arith.constant 0 : i32
    %c0_i32_1 = arith.constant 0 : i32
    return %c0_i32, %c0_i32_0 : i32, i32
  }
  func.func @transform_7(%arg0: i32) -> (i32, i32) {
    %c0_i32 = arith.constant 0 : i32
    %c0_i32_0 = arith.constant 0 : i32
    return %c0_i32, %arg0 : i32, i32
  }
}

</mosaic_0001>

<llo_original>
// kernel: tpu_custom_call.1
$region0: #{tpu_custom_call.1}
  #allocation0 [shape = 'u32[]', space=smem, size = 0x4, offset = 0x4, fixed_abs, tag = 'smem constant byte address 0x4 - core index']
  #allocation1 [shape = 'u32[144,128]{1,0:T(1,128)}', space=vmem, size = 0x12000, scoped, tag = 'internal scratch']
  #allocation2 [shape = 'f32[1,1]{1,0:T(1,128)S(1)}', space=vmem, size = 0x200, scoped, tag = 'scoped memory for tpu_custom_call.1']
  %s0 = inlined_call_operand.vmem [shape: bf16[16,256], index: 0, kind: input, shape index: {}]
  %s1 = inlined_call_operand.vmem [shape: bf16[128,16], index: 1, kind: input, shape index: {}]
  %s2 = inlined_call_operand.vmem [shape: f32[128,1], index: 2, kind: input, shape index: {}]
  %s3 = inlined_call_operand.vmem [shape: bf16[128,128], index: 3, kind: input, shape index: {}]
  %s4 = inlined_call_operand.vmem [shape: f32[128,1], index: 4, kind: input, shape index: {}]
  %s5 = inlined_call_operand.vmem [shape: bf16[1,128], index: 5, kind: input, shape index: {}]
  %s6 = inlined_call_operand.<no memory space> [shape: f32[1,1], index: 6, kind: input, shape index: {}]
  %s7 = inlined_call_operand.hbm [shape: f32[1,256], index: 7, kind: output, shape index: {}]
  %s8 = sld [smem:[#allocation0]]
  $region102: #{tpu_custom_call.1} parent=0
    _
  %s10 = ssub.s32 1, %s8
  %s11 = scalar_select 0, %s10, %s8
  %v12 = vstv %s6
  %13 = vst [vmem:[#allocation2] sm:$0x1] %v12
  $region1: #{tpu_custom_call.1} parent=0
    #allocation3 [shape = 'u8[8192]{0}', space=vmem, size = 0x2000, scoped, tag = 'input window, operand 0']
    #allocation4 [shape = 'u8[1024]{0}', space=vmem, size = 0x400, scoped, tag = 'output window, operand 0']
    #allocation5 [shape = 's32[2]{0}', space=sflag, size = 0x8, scoped, tag = 'scoped memory for tpu_custom_call.1']
    %14 = vsyncpa [#allocation5], 0
    %s15 = scalar_lea.sflag [#allocation5], 1
    %16 = vsyncpa %s15, 0
    loop: start=0, step=1, limit=4
    $region2: #{tpu_custom_call.1} parent=1 // loop_pre_header
      _
    $region3: #{tpu_custom_call.1} parent=1 // loop_header
      %s18 = sphi 0, %s22
      %p19 = scmp.ge.s32.totalorder %s18, 4
      %s28 = sphi 0, %s30
      %s31 = sphi 0, %s28
      %s32 = sphi 0, %s31
      %s48 = sphi 0, %s32
      %s52 = sphi 0, %s52
      %s54 = sphi 0, %s52
      %s55 = sphi 0, %s54
      %s69 = sphi 0, %s55
      %s73 = sphi 0, %s73
      %s75 = sphi 0, %s73
      %s76 = sphi 0, %s75
      %s90 = sphi 0, %s76
      %s94 = sphi 0, %s94
      %s96 = sphi 0, %s94
      %s97 = sphi 0, %s96
      %s111 = sphi 0, %s97
      %s115 = sphi 0, %s115
      %s117 = sphi 0, %s115
      %s118 = sphi 0, %s117
      %s132 = sphi 0, %s118
      %s136 = sphi 0, %s136
      %s138 = sphi 0, %s136
      %s139 = sphi 0, %s138
      %s153 = sphi 0, %s139
      %s157 = sphi 0, %s157
      %s159 = sphi 0, %s157
      %s160 = sphi 0, %s159
      %s174 = sphi 0, %s160
      %s180 = sphi 0, %s182
      %s183 = sphi 0, %s180
      %s184 = sphi 0, %s183
      %s200 = sphi 0, %s184
    $region4: #{tpu_custom_call.1} parent=1 // loop_header_branch
      %21 = sbr.rel (%p19) target = $region8
    $region5: #{tpu_custom_call.1} parent=1 // loop_body
      %s23 = ssub.s32 %s18, 1
      %s24 = ssub.s32 %s18, 2
      %s25 = sadd.s32 %s18, 1
      %s26 = ssub.s32 %s18, %s25
      %p27 = scmp.eq.s32.totalorder %s26, 0
      %s29 = sadd.s32 %s28, 1
      %s30 = scalar_select %p27, %s28, %s29
      %p33 = pneg %p27
      %p34 = scmp.eq.s32.totalorder %s18, 1
      %p35 = por %p33, %p34
      %p36 = scmp.ne.s32.totalorder %s28, %s31
      %p37 = scmp.eq.s32.totalorder %s18, 0
      %p38 = por %p36, %p37
      %p39 = scmp.ne.s32.totalorder %s28, %s31
      %p40 = scmp.eq.s32.totalorder %s23, 1
      %p41 = por %p39, %p40
      %p42 = scmp.ne.s32.totalorder %s31, %s32
      %p43 = scmp.eq.s32.totalorder %s23, 0
      %p44 = por %p42, %p43
      %p45 = scmp.ne.s32.totalorder %s31, %s32
      %p46 = scmp.eq.s32.totalorder %s24, 1
      %p47 = por %p45, %p46
      %p49 = scmp.ne.s32.totalorder %s32, %s48
      %p50 = scmp.eq.s32.totalorder %s24, 0
      %p51 = por %p49, %p50
      %s53 = sadd.s32 %s52, 1
      %p56 = scmp.eq.s32.totalorder %s18, 1
      %p57 = scmp.ne.s32.totalorder %s52, %s54
      %p58 = scmp.eq.s32.totalorder %s18, 0
      %p59 = por %p57, %p58
      %p60 = scmp.ne.s32.totalorder %s52, %s54
      %p61 = scmp.eq.s32.totalorder %s23, 1
      %p62 = por %p60, %p61
      %p63 = scmp.ne.s32.totalorder %s54, %s55
      %p64 = scmp.eq.s32.totalorder %s23, 0
      %p65 = por %p63, %p64
      %p66 = scmp.ne.s32.totalorder %s54, %s55
      %p67 = scmp.eq.s32.totalorder %s24, 1
      %p68 = por %p66, %p67
      %p70 = scmp.ne.s32.totalorder %s55, %s69
      %p71 = scmp.eq.s32.totalorder %s24, 0
      %p72 = por %p70, %p71
      %s74 = sadd.s32 %s73, 1
      %p77 = scmp.eq.s32.totalorder %s18, 1
      %p78 = scmp.ne.s32.totalorder %s73, %s75
      %p79 = scmp.eq.s32.totalorder %s18, 0
      %p80 = por %p78, %p79
      %p81 = scmp.ne.s32.totalorder %s73, %s75
      %p82 = scmp.eq.s32.totalorder %s23, 1
      %p83 = por %p81, %p82
      %p84 = scmp.ne.s32.totalorder %s75, %s76
      %p85 = scmp.eq.s32.totalorder %s23, 0
      %p86 = por %p84, %p85
      %p87 = scmp.ne.s32.totalorder %s75, %s76
      %p88 = scmp.eq.s32.totalorder %s24, 1
      %p89 = por %p87, %p88
      %p91 = scmp.ne.s32.totalorder %s76, %s90
      %p92 = scmp.eq.s32.totalorder %s24, 0
      %p93 = por %p91, %p92
      %s95 = sadd.s32 %s94, 1
      %p98 = scmp.eq.s32.totalorder %s18, 1
      %p99 = scmp.ne.s32.totalorder %s94, %s96
      %p100 = scmp.eq.s32.totalorder %s18, 0
      %p101 = por %p99, %p100
      %p102 = scmp.ne.s32.totalorder %s94, %s96
      %p103 = scmp.eq.s32.totalorder %s23, 1
      %p104 = por %p102, %p103
      %p105 = scmp.ne.s32.totalorder %s96, %s97
      %p106 = scmp.eq.s32.totalorder %s23, 0
      %p107 = por %p105, %p106
      %p108 = scmp.ne.s32.totalorder %s96, %s97
      %p109 = scmp.eq.s32.totalorder %s24, 1
      %p110 = por %p108, %p109
      %p112 = scmp.ne.s32.totalorder %s97, %s111
      %p113 = scmp.eq.s32.totalorder %s24, 0
      %p114 = por %p112, %p113
      %s116 = sadd.s32 %s115, 1
      %p119 = scmp.eq.s32.totalorder %s18, 1
      %p120 = scmp.ne.s32.totalorder %s115, %s117
      %p121 = scmp.eq.s32.totalorder %s18, 0
      %p122 = por %p120, %p121
      %p123 = scmp.ne.s32.totalorder %s115, %s117
      %p124 = scmp.eq.s32.totalorder %s23, 1
      %p125 = por %p123, %p124
      %p126 = scmp.ne.s32.totalorder %s117, %s118
      %p127 = scmp.eq.s32.totalorder %s23, 0
      %p128 = por %p126, %p127
      %p129 = scmp.ne.s32.totalorder %s117, %s118
      %p130 = scmp.eq.s32.totalorder %s24, 1
      %p131 = por %p129, %p130
      %p133 = scmp.ne.s32.totalorder %s118, %s132
      %p134 = scmp.eq.s32.totalorder %s24, 0
      %p135 = por %p133, %p134
      %s137 = sadd.s32 %s136, 1
      %p140 = scmp.eq.s32.totalorder %s18, 1
      %p141 = scmp.ne.s32.totalorder %s136, %s138
      %p142 = scmp.eq.s32.totalorder %s18, 0
      %p143 = por %p141, %p142
      %p144 = scmp.ne.s32.totalorder %s136, %s138
      %p145 = scmp.eq.s32.totalorder %s23, 1
      %p146 = por %p144, %p145
      %p147 = scmp.ne.s32.totalorder %s138, %s139
      %p148 = scmp.eq.s32.totalorder %s23, 0
      %p149 = por %p147, %p148
      %p150 = scmp.ne.s32.totalorder %s138, %s139
      %p151 = scmp.eq.s32.totalorder %s24, 1
      %p152 = por %p150, %p151
      %p154 = scmp.ne.s32.totalorder %s139, %s153
      %p155 = scmp.eq.s32.totalorder %s24, 0
      %p156 = por %p154, %p155
      %s158 = sadd.s32 %s157, 1
      %p161 = scmp.eq.s32.totalorder %s18, 1
      %p162 = scmp.ne.s32.totalorder %s157, %s159
      %p163 = scmp.eq.s32.totalorder %s18, 0
      %p164 = por %p162, %p163
      %p165 = scmp.ne.s32.totalorder %s157, %s159
      %p166 = scmp.eq.s32.totalorder %s23, 1
      %p167 = por %p165, %p166
      %p168 = scmp.ne.s32.totalorder %s159, %s160
      %p169 = scmp.eq.s32.totalorder %s23, 0
      %p170 = por %p168, %p169
      %p171 = scmp.ne.s32.totalorder %s159, %s160
      %p172 = scmp.eq.s32.totalorder %s24, 1
      %p173 = por %p171, %p172
      %p175 = scmp.ne.s32.totalorder %s160, %s174
      %p176 = scmp.eq.s32.totalorder %s24, 0
      %p177 = por %p175, %p176
      %s178 = ssub.s32 %s18, %s25
      %p179 = scmp.eq.s32.totalorder %s178, 0
      %s181 = sadd.s32 %s180, 1
      %s182 = scalar_select %p179, %s180, %s181
      %p185 = pneg %p179
      %p186 = scmp.eq.s32.totalorder %s18, 1
      %p187 = por %p185, %p186
      %p188 = scmp.ne.s32.totalorder %s180, %s183
      %p189 = scmp.eq.s32.totalorder %s18, 0
      %p190 = por %p188, %p189
      %p191 = scmp.ne.s32.totalorder %s180, %s183
      %p192 = scmp.eq.s32.totalorder %s23, 1
      %p193 = por %p191, %p192
      %p194 = scmp.ne.s32.totalorder %s183, %s184
      %p195 = scmp.eq.s32.totalorder %s23, 0
      %p196 = por %p194, %p195
      %p197 = scmp.ne.s32.totalorder %s183, %s184
      %p198 = scmp.eq.s32.totalorder %s24, 1
      %p199 = por %p197, %p198
      %p201 = scmp.ne.s32.totalorder %s184, %s200
      %p202 = scmp.eq.s32.totalorder %s24, 0
      %p203 = por %p201, %p202
      %p204 = scmp.le.s32.totalorder 1, %s18
      %p205 = scmp.lt.s32.totalorder %s18, 3
      %p206 = pnand %p204, %p205
      %p207 = pneg %p206
      // Predicated region
      $region9: #{tpu_custom_call.1} parent=5 // pred_check
        _
      $region10: #{tpu_custom_call.1} parent=5 // pred_check_branch
        %209 = sbr.rel (%p206) target = $region12
      $region11: #{tpu_custom_call.1} parent=5 // pred_region
        %s210 = ssub.s32 %s18, 1
        // Predicated region
        $region13: #{tpu_custom_call.1} parent=11 // pred_check
          %p211 = pneg %p65
        $region14: #{tpu_custom_call.1} parent=11 // pred_check_branch
          %213 = sbr.rel (%p211) target = $region16
        $region15: #{tpu_custom_call.1} parent=11 // pred_region
          _
        $region16: #{tpu_custom_call.1} parent=11 // pred_fallthru
          _
        // Predicated region
        $region17: #{tpu_custom_call.1} parent=11 // pred_check
          %p214 = pneg %p86
        $region18: #{tpu_custom_call.1} parent=11 // pred_check_branch
          %216 = sbr.rel (%p214) target = $region20
        $region19: #{tpu_custom_call.1} parent=11 // pred_region
          _
        $region20: #{tpu_custom_call.1} parent=11 // pred_fallthru
          _
        // Predicated region
        $region21: #{tpu_custom_call.1} parent=11 // pred_check
          %p217 = pneg %p107
        $region22: #{tpu_custom_call.1} parent=11 // pred_check_branch
          %219 = sbr.rel (%p217) target = $region24
        $region23: #{tpu_custom_call.1} parent=11 // pred_region
          _
        $region24: #{tpu_custom_call.1} parent=11 // pred_fallthru
          _
        // Predicated region
        $region25: #{tpu_custom_call.1} parent=11 // pred_check
          %p220 = pneg %p128
        $region26: #{tpu_custom_call.1} parent=11 // pred_check_branch
          %222 = sbr.rel (%p220) target = $region28
        $region27: #{tpu_custom_call.1} parent=11 // pred_region
          _
        $region28: #{tpu_custom_call.1} parent=11 // pred_fallthru
          _
        // Predicated region
        $region29: #{tpu_custom_call.1} parent=11 // pred_check
          %p223 = pneg %p149
        $region30: #{tpu_custom_call.1} parent=11 // pred_check_branch
          %225 = sbr.rel (%p223) target = $region32
        $region31: #{tpu_custom_call.1} parent=11 // pred_region
          _
        $region32: #{tpu_custom_call.1} parent=11 // pred_fallthru
          _
        // Predicated region
        $region33: #{tpu_custom_call.1} parent=11 // pred_check
          %p226 = pneg %p170
        $region34: #{tpu_custom_call.1} parent=11 // pred_check_branch
          %228 = sbr.rel (%p226) target = $region36
        $region35: #{tpu_custom_call.1} parent=11 // pred_region
          _
        $region36: #{tpu_custom_call.1} parent=11 // pred_fallthru
          _
      $region12: #{tpu_custom_call.1} parent=5 // pred_fallthru
        _
      %p229 = scmp.lt.s32.totalorder %s18, 2
      // Predicated region
      $region37: #{tpu_custom_call.1} parent=5 // pred_check
        %p230 = pneg %p229
      $region38: #{tpu_custom_call.1} parent=5 // pred_check_branch
        %232 = sbr.rel (%p230) target = $region40
      $region39: #{tpu_custom_call.1} parent=5 // pred_region
        // Predicated region
        $region41: #{tpu_custom_call.1} parent=39 // pred_check
          %p233 = pneg %p38
        $region42: #{tpu_custom_call.1} parent=39 // pred_check_branch
          %235 = sbr.rel (%p233) target = $region44
        $region43: #{tpu_custom_call.1} parent=39 // pred_region
          %s236 = sand.u32 %s28, 1
          %s237 = sand.u32 %s28, 1
          %s238 = smul.addr %s237, 8
          %s239 = scalar_lea.vmem [#allocation3], %s238
          %s240 = smul.addr %s18, 4
          %s241 = scalar_lea.vmem %s0, %s240
          // Predicated region
          $region45: #{tpu_custom_call.1} parent=43 // pred_check
            _
          $region46: #{tpu_custom_call.1} parent=43 // pred_check_branch
            %243 = sbr.rel (0) target = $region48
          $region47: #{tpu_custom_call.1} parent=43 // pred_region
            // Predicated region
            $region49: #{tpu_custom_call.1} parent=47 // pred_check
              _
            $region50: #{tpu_custom_call.1} parent=47 // pred_check_branch
              %245 = sbr.rel target = $region52
            $region51: #{tpu_custom_call.1} parent=47 // pred_region
              // Predicated region
              $region64: #{tpu_custom_call.1} parent=51 // pred_check
                _
              $region65: #{tpu_custom_call.1} parent=51 // pred_check_branch
                %262 = sbr.rel (0) target = $region67
              $region66: #{tpu_custom_call.1} parent=51 // pred_region
                loop: start=0, step=1, limit=1
                $region68: #{tpu_custom_call.1} parent=66 // loop_pre_header
                  _
                $region69: #{tpu_custom_call.1} parent=66 // loop_header
                  %s264 = sphi 0, %s268
                  %p265 = scmp.ge.s32.totalorder %s264, 1
                  %s269 = sphi %s241, %s241
                  %s270 = sphi %s239, %s239
                $region70: #{tpu_custom_call.1} parent=66 // loop_header_branch
                  %267 = sbr.rel (%p265) target = $region74
                $region71: #{tpu_custom_call.1} parent=66 // loop_body
                  _
                $region72: #{tpu_custom_call.1} parent=66 // loop_footer
                  %s268 = sadd.s32 1, %s264
                $region73: #{tpu_custom_call.1} parent=66 // loop_footer_branch
                  %263 = sbr.rel target = $region69
                $region74: #{tpu_custom_call.1} parent=66 // loop_exit
                  _
                loop: start=0, step=1, limit=1
                $region75: #{tpu_custom_call.1} parent=66 // loop_pre_header
                  _
                $region76: #{tpu_custom_call.1} parent=66 // loop_header
                  %s273 = sphi 0, %s277
                  %p274 = scmp.ge.s32.totalorder %s273, 1
                  %s278 = sphi %s241, %s241
                  %s279 = sphi %s239, %s239
                $region77: #{tpu_custom_call.1} parent=66 // loop_header_branch
                  %276 = sbr.rel (%p274) target = $region81
                $region78: #{tpu_custom_call.1} parent=66 // loop_body
                  %v280 = vld [vmem:[%s278] sm:$0xf]
                  %281 = vst [vmem:[%s279] sm:$0xf] %v280
                  %v282 = vld [vmem:[%s278 + $0x8] sm:$0xf]
                  %283 = vst [vmem:[%s279 + $0x4] sm:$0xf] %v282
                $region79: #{tpu_custom_call.1} parent=66 // loop_footer
                  %s277 = sadd.s32 1, %s273
                $region80: #{tpu_custom_call.1} parent=66 // loop_footer_branch
                  %272 = sbr.rel target = $region76
                $region81: #{tpu_custom_call.1} parent=66 // loop_exit
                  _
              $region67: #{tpu_custom_call.1} parent=51 // pred_fallthru
                _
            $region52: #{tpu_custom_call.1} parent=47 // pred_fallthru
              _
            // Predicated region
            $region53: #{tpu_custom_call.1} parent=47 // pred_check
              _
            $region54: #{tpu_custom_call.1} parent=47 // pred_check_branch
              %247 = sbr.rel (0) target = $region56
            $region55: #{tpu_custom_call.1} parent=47 // pred_region
              loop: start=0, step=1, limit=1
              $region57: #{tpu_custom_call.1} parent=55 // loop_pre_header
                _
              $region58: #{tpu_custom_call.1} parent=55 // loop_header
                %s250 = sphi 0, %s254
                %p251 = scmp.ge.s32.totalorder %s250, 1
                %s255 = sphi %s241, %s241
                %s256 = sphi %s239, %s239
              $region59: #{tpu_custom_call.1} parent=55 // loop_header_branch
                %253 = sbr.rel (%p251) target = $region63
              $region60: #{tpu_custom_call.1} parent=55 // loop_body
                %v257 = vld [vmem:[%s255] sm:$0xf]
                %258 = vst [vmem:[%s256] sm:$0xf] %v257
                %v259 = vld [vmem:[%s255 + $0x8] sm:$0xf]
                %260 = vst [vmem:[%s256 + $0x4] sm:$0xf] %v259
              $region61: #{tpu_custom_call.1} parent=55 // loop_footer
                %s254 = sadd.s32 1, %s250
              $region62: #{tpu_custom_call.1} parent=55 // loop_footer_branch
                %249 = sbr.rel target = $region58
              $region63: #{tpu_custom_call.1} parent=55 // loop_exit
                _
            $region56: #{tpu_custom_call.1} parent=47 // pred_fallthru
              _
          $region48: #{tpu_custom_call.1} parent=43 // pred_fallthru
            _
          %284 = vnop
        $region44: #{tpu_custom_call.1} parent=39 // pred_fallthru
          _
      $region40: #{tpu_custom_call.1} parent=5 // pred_fallthru
        _
      %p285 = scmp.le.s32.totalorder 1, %s18
      %p286 = scmp.lt.s32.totalorder %s18, 3
      %p287 = pnand %p285, %p286
      %p288 = pneg %p287
      // Predicated region
      $region82: #{tpu_custom_call.1} parent=5 // pred_check
        _
      $region83: #{tpu_custom_call.1} parent=5 // pred_check_branch
        %290 = sbr.rel (%p287) target = $region85
      $region84: #{tpu_custom_call.1} parent=5 // pred_region
        %s291 = ssub.s32 %s18, 1
        %s292 = sand.u32 %s31, 1
        %s293 = sand.u32 %s31, 1
        %s294 = smul.addr %s293, 8
        %s295 = scalar_lea.vmem [#allocation3], %s294
        // Predicated region
        $region86: #{tpu_custom_call.1} parent=84 // pred_check
          %p296 = pneg %p44
        $region87: #{tpu_custom_call.1} parent=84 // pred_check_branch
          %298 = sbr.rel (%p296) target = $region89
        $region88: #{tpu_custom_call.1} parent=84 // pred_region
          _
        $region89: #{tpu_custom_call.1} parent=84 // pred_fallthru
          _
        %s299 = sand.u32 %s31, 1
        %s300 = sand.u32 %s31, 1
        %s301 = smul.addr %s300, 8
        %s302 = scalar_lea.vmem [#allocation3], %s301
        %p303 = pneg %p44
        %p304 = pneg %p41
        %p305 = pneg %p65
        %p306 = pneg %p62
        %p307 = pneg %p86
        %p308 = pneg %p83
        %p309 = pneg %p107
        %p310 = pneg %p104
        %p311 = pneg %p128
        %p312 = pneg %p125
        %p313 = pneg %p149
        %p314 = pneg %p146
        %p315 = pneg %p170
        %p316 = pneg %p167
        %p317 = pneg %p196
        %p318 = pneg %p193
        %s319 = sand.u32 %s183, 1
        %s320 = scalar_lea.sflag [#allocation5], %s319
        %s321 = sand.u32 %s183, 1
        %s322 = scalar_lea.vmem [#allocation4], %s321
        %v324 = vld [vmem:[%s295] sm:$0xf]
        %v325 = vld [vmem:[%s295 + $0x4] sm:$0xf]
        %v326 = vld [vmem:[%s1] sm:$0xf]
        %v327 = vld [vmem:[%s1 + $0x4] sm:$0xf]
        %v328 = vld [vmem:[%s1 + $0x8] sm:$0xf]
        %v329 = vld [vmem:[%s1 + $0xc] sm:$0xf]
        %v330 = vld [vmem:[%s1 + $0x10] sm:$0xf]
        %v331 = vld [vmem:[%s1 + $0x14] sm:$0xf]
        %v332 = vld [vmem:[%s1 + $0x18] sm:$0xf]
        %v333 = vld [vmem:[%s1 + $0x1c] sm:$0xf]
        %v334 = vld [vmem:[%s1 + $0x20] sm:$0xf]
        %v335 = vld [vmem:[%s1 + $0x24] sm:$0xf]
        %v336 = vld [vmem:[%s1 + $0x28] sm:$0xf]
        %v337 = vld [vmem:[%s1 + $0x2c] sm:$0xf]
        %v338 = vld [vmem:[%s1 + $0x30] sm:$0xf]
        %v339 = vld [vmem:[%s1 + $0x34] sm:$0xf]
        %v340 = vld [vmem:[%s1 + $0x38] sm:$0xf]
        %v341 = vld [vmem:[%s1 + $0x3c] sm:$0xf]
        %v342 = vld [vmem:[%s2] sm:$0xff]
        %v343 = vld [vmem:[%s2 + $0x8] sm:$0xff]
        %v344 = vld [vmem:[%s2 + $0x10] sm:$0xff]
        %v345 = vld [vmem:[%s2 + $0x18] sm:$0xff]
        %v346 = vld [vmem:[%s2 + $0x20] sm:$0xff]
        %v347 = vld [vmem:[%s2 + $0x28] sm:$0xff]
        %v348 = vld [vmem:[%s2 + $0x30] sm:$0xff]
        %v349 = vld [vmem:[%s2 + $0x38] sm:$0xff]
        %v350 = vld [vmem:[%s2 + $0x40] sm:$0xff]
        %v351 = vld [vmem:[%s2 + $0x48] sm:$0xff]
        %v352 = vld [vmem:[%s2 + $0x50] sm:$0xff]
        %v353 = vld [vmem:[%s2 + $0x58] sm:$0xff]
        %v354 = vld [vmem:[%s2 + $0x60] sm:$0xff]
        %v355 = vld [vmem:[%s2 + $0x68] sm:$0xff]
        %v356 = vld [vmem:[%s2 + $0x70] sm:$0xff]
        %v357 = vld [vmem:[%s2 + $0x78] sm:$0xff]
        %359 = vset.pattern.permute.xlu0 0
        %360 = vperm.xlu0 %359, %v342
        %v361 = vpop.permute.xlu0 %360
        %364 = vset.pattern.permute.xlu0 0
        %365 = vperm.xlu0 %364, %v343
        %v366 = vpop.permute.xlu0 %365
        %369 = vset.pattern.permute.xlu0 0
        %370 = vperm.xlu0 %369, %v344
        %v371 = vpop.permute.xlu0 %370
        %374 = vset.pattern.permute.xlu0 0
        %375 = vperm.xlu0 %374, %v345
        %v376 = vpop.permute.xlu0 %375
        %379 = vset.pattern.permute.xlu0 0
        %380 = vperm.xlu0 %379, %v346
        %v381 = vpop.permute.xlu0 %380
        %384 = vset.pattern.permute.xlu0 0
        %385 = vperm.xlu0 %384, %v347
        %v386 = vpop.permute.xlu0 %385
        %389 = vset.pattern.permute.xlu0 0
        %390 = vperm.xlu0 %389, %v348
        %v391 = vpop.permute.xlu0 %390
        %394 = vset.pattern.permute.xlu0 0
        %395 = vperm.xlu0 %394, %v349
        %v396 = vpop.permute.xlu0 %395
        %399 = vset.pattern.permute.xlu0 0
        %400 = vperm.xlu0 %399, %v350
        %v401 = vpop.permute.xlu0 %400
        %404 = vset.pattern.permute.xlu0 0
        %405 = vperm.xlu0 %404, %v351
        %v406 = vpop.permute.xlu0 %405
        %409 = vset.pattern.permute.xlu0 0
        %410 = vperm.xlu0 %409, %v352
        %v411 = vpop.permute.xlu0 %410
        %414 = vset.pattern.permute.xlu0 0
        %415 = vperm.xlu0 %414, %v353
        %v416 = vpop.permute.xlu0 %415
        %419 = vset.pattern.permute.xlu0 0
        %420 = vperm.xlu0 %419, %v354
        %v421 = vpop.permute.xlu0 %420
        %424 = vset.pattern.permute.xlu0 0
        %425 = vperm.xlu0 %424, %v355
        %v426 = vpop.permute.xlu0 %425
        %429 = vset.pattern.permute.xlu0 0
        %430 = vperm.xlu0 %429, %v356
        %v431 = vpop.permute.xlu0 %430
        %434 = vset.pattern.permute.xlu0 0
        %435 = vperm.xlu0 %434, %v357
        %v436 = vpop.permute.xlu0 %435
        %v454 = vunpack.c.l.b16 %v326
        %v455 = vunpack.c.l.b16 %v327
        %v456 = vunpack.c.l.b16 %v328
        %v457 = vunpack.c.l.b16 %v329
        %v458 = vunpack.c.l.b16 %v330
        %v459 = vunpack.c.l.b16 %v331
        %v460 = vunpack.c.l.b16 %v332
        %v461 = vunpack.c.l.b16 %v333
        %v462 = vunpack.c.l.b16 %v334
        %v463 = vunpack.c.l.b16 %v335
        %v464 = vunpack.c.l.b16 %v336
        %v465 = vunpack.c.l.b16 %v337
        %v466 = vunpack.c.l.b16 %v338
        %v467 = vunpack.c.l.b16 %v339
        %v468 = vunpack.c.l.b16 %v340
        %v469 = vunpack.c.l.b16 %v341
        %v470 = vpack.c.b16 %v455, %v454
        %v471 = vpack.c.b16 %v457, %v456
        %v472 = vpack.c.b16 %v459, %v458
        %v473 = vpack.c.b16 %v461, %v460
        %v474 = vpack.c.b16 %v463, %v462
        %v475 = vpack.c.b16 %v465, %v464
        %v476 = vpack.c.b16 %v467, %v466
        %v477 = vpack.c.b16 %v469, %v468
        %v480 = vunpack.c.l.b16 %v324
        %v481 = vunpack.c.l.b16 %v325
        %v482 = vpack.c.b16 %v481, %v480
        %vm484 = vcmask 130048
        %v486 = vsel %vm484, %v470, 0
        %v489 = vsel %vm484, %v471, 0
        %v492 = vsel %vm484, %v472, 0
        %v495 = vsel %vm484, %v473, 0
        %v498 = vsel %vm484, %v474, 0
        %v501 = vsel %vm484, %v475, 0
        %v504 = vsel %vm484, %v476, 0
        %v507 = vsel %vm484, %v477, 0
        %509 = vmatprep.subr.bf16.mxu0 0
        %510 = vmatpush1.bf16.msra.mxu0 %v482
        %511 = vmatprep.subr.bf16.mxu0 0
        %512 = vmatpush1.bf16.msra.mxu0 0
        %513 = vmatprep.subr.bf16.mxu0 0
        %514 = vmatpush1.bf16.msra.mxu0 0
        %515 = vmatprep.subr.bf16.mxu0 0
        %516 = vmatpush1.bf16.msra.mxu0 0
        %517 = vmatprep.subr.bf16.mxu0 0
        %518 = vmatpush1.bf16.msra.mxu0 0
        %519 = vmatprep.subr.bf16.mxu0 0
        %520 = vmatpush1.bf16.msra.mxu0 0
        %521 = vmatprep.subr.bf16.mxu0 0
        %522 = vmatpush1.bf16.msra.mxu0 0
        %523 = vmatprep.subr.bf16.mxu0 0
        %524 = vmatpush1.bf16.msra.mxu0 0
        %525 = vmatprep.subr.bf16.mxu0 0
        %526 = vmatpush1.bf16.msra.mxu0 0
        %527 = vmatprep.subr.bf16.mxu0 0
        %528 = vmatpush1.bf16.msra.mxu0 0
        %529 = vmatprep.subr.bf16.mxu0 0
        %530 = vmatpush1.bf16.msra.mxu0 0
        %531 = vmatprep.subr.bf16.mxu0 0
        %532 = vmatpush1.bf16.msra.mxu0 0
        %533 = vmatprep.subr.bf16.mxu0 0
        %534 = vmatpush1.bf16.msra.mxu0 0
        %535 = vmatprep.subr.bf16.mxu0 0
        %536 = vmatpush1.bf16.msra.mxu0 0
        %537 = vmatprep.subr.bf16.mxu0 0
        %538 = vmatpush1.bf16.msra.mxu0 0
        %539 = vmatprep.subr.bf16.mxu0 0
        %540 = vmatpush1.bf16.msra.mxu0 0
        %541 = vmatprep.mubr.bf16.mxu0 0
        %542 = vmatmul.mubr.bf16.gmra.mrb[0].mxu0 %v486
        %v543 = vpop.f32.mrb[0].mxu0
        %v544 = vadd.f32 %v361, %v543
        %v545 = vpop.f32.mrb[0].mxu0
        %v546 = vpop.f32.mrb[0].mxu0
        %v547 = vadd.f32 %v366, %v546
        %v548 = vpop.f32.mrb[0].mxu0
        %549 = vmatprep.mubr.bf16.mxu0 0
        %550 = vmatmul.mubr.bf16.gmra.mrb[0].mxu0 %v489
        %v551 = vpop.f32.mrb[0].mxu0
        %v552 = vadd.f32 %v371, %v551
        %v553 = vpop.f32.mrb[0].mxu0
        %v554 = vpop.f32.mrb[0].mxu0
        %v555 = vadd.f32 %v376, %v554
        %v556 = vpop.f32.mrb[0].mxu0
        %557 = vmatprep.mubr.bf16.mxu0 0
        %558 = vmatmul.mubr.bf16.gmra.mrb[0].mxu0 %v492
        %v559 = vpop.f32.mrb[0].mxu0
        %v560 = vadd.f32 %v381, %v559
        %v561 = vpop.f32.mrb[0].mxu0
        %v562 = vpop.f32.mrb[0].mxu0
        %v563 = vadd.f32 %v386, %v562
        %v564 = vpop.f32.mrb[0].mxu0
        %565 = vmatprep.mubr.bf16.mxu0 0
        %566 = vmatmul.mubr.bf16.gmra.mrb[0].mxu0 %v495
        %v567 = vpop.f32.mrb[0].mxu0
        %v568 = vadd.f32 %v391, %v567
        %v569 = vpop.f32.mrb[0].mxu0
        %v570 = vpop.f32.mrb[0].mxu0
        %v571 = vadd.f32 %v396, %v570
        %v572 = vpop.f32.mrb[0].mxu0
        %573 = vmatprep.mubr.bf16.mxu0 0
        %574 = vmatmul.mubr.bf16.gmra.mrb[0].mxu0 %v498
        %v575 = vpop.f32.mrb[0].mxu0
        %v576 = vadd.f32 %v401, %v575
        %v577 = vpop.f32.mrb[0].mxu0
        %v578 = vpop.f32.mrb[0].mxu0
        %v579 = vadd.f32 %v406, %v578
        %v580 = vpop.f32.mrb[0].mxu0
        %581 = vmatprep.mubr.bf16.mxu0 0
        %582 = vmatmul.mubr.bf16.gmra.mrb[0].mxu0 %v501
        %v583 = vpop.f32.mrb[0].mxu0
        %v584 = vadd.f32 %v411, %v583
        %v585 = vpop.f32.mrb[0].mxu0
        %v586 = vpop.f32.mrb[0].mxu0
        %v587 = vadd.f32 %v416, %v586
        %v588 = vpop.f32.mrb[0].mxu0
        %589 = vmatprep.mubr.bf16.mxu0 0
        %590 = vmatmul.mubr.bf16.gmra.mrb[0].mxu0 %v504
        %v591 = vpop.f32.mrb[0].mxu0
        %v592 = vadd.f32 %v421, %v591
        %v593 = vpop.f32.mrb[0].mxu0
        %v594 = vpop.f32.mrb[0].mxu0
        %v595 = vadd.f32 %v426, %v594
        %v596 = vpop.f32.mrb[0].mxu0
        %597 = vmatprep.mubr.bf16.mxu0 0
        %598 = vmatmul.mubr.bf16.gmra.mrb[0].mxu0 %v507
        %v599 = vpop.f32.mrb[0].mxu0
        %v600 = vadd.f32 %v431, %v599
        %v601 = vpop.f32.mrb[0].mxu0
        %v602 = vpop.f32.mrb[0].mxu0
        %v603 = vadd.f32 %v436, %v602
        %v604 = vpop.f32.mrb[0].mxu0
        %605 = vdwg.mxu0
        %v606 = vmax.f32 %v544, 0.0
        %v607 = vmax.f32 %v547, 0.0
        %v608 = vmax.f32 %v552, 0.0
        %v609 = vmax.f32 %v555, 0.0
        %v610 = vmax.f32 %v560, 0.0
        %v611 = vmax.f32 %v563, 0.0
        %v612 = vmax.f32 %v568, 0.0
        %v613 = vmax.f32 %v571, 0.0
        %v614 = vmax.f32 %v576, 0.0
        %v615 = vmax.f32 %v579, 0.0
        %v616 = vmax.f32 %v584, 0.0
        %v617 = vmax.f32 %v587, 0.0
        %v618 = vmax.f32 %v592, 0.0
        %v619 = vmax.f32 %v595, 0.0
        %v620 = vmax.f32 %v600, 0.0
        %v621 = vmax.f32 %v603, 0.0
        %v622 = vld [vmem:[%s3] sm:$0xf]
        %v623 = vld [vmem:[%s3 + $0x4] sm:$0xf]
        %v624 = vld [vmem:[%s3 + $0x8] sm:$0xf]
        %v625 = vld [vmem:[%s3 + $0xc] sm:$0xf]
        %v626 = vld [vmem:[%s3 + $0x10] sm:$0xf]
        %v627 = vld [vmem:[%s3 + $0x14] sm:$0xf]
        %v628 = vld [vmem:[%s3 + $0x18] sm:$0xf]
        %v629 = vld [vmem:[%s3 + $0x1c] sm:$0xf]
        %v630 = vld [vmem:[%s3 + $0x20] sm:$0xf]
        %v631 = vld [vmem:[%s3 + $0x24] sm:$0xf]
        %v632 = vld [vmem:[%s3 + $0x28] sm:$0xf]
        %v633 = vld [vmem:[%s3 + $0x2c] sm:$0xf]
        %v634 = vld [vmem:[%s3 + $0x30] sm:$0xf]
        %v635 = vld [vmem:[%s3 + $0x34] sm:$0xf]
        %v636 = vld [vmem:[%s3 + $0x38] sm:$0xf]
        %v637 = vld [vmem:[%s3 + $0x3c] sm:$0xf]
        %v638 = vpack.c.bf16 %v607, %v606
        %v639 = vpack.c.bf16 %v609, %v608
        %v640 = vpack.c.bf16 %v611, %v610
        %v641 = vpack.c.bf16 %v613, %v612
        %v642 = vpack.c.bf16 %v615, %v614
        %v643 = vpack.c.bf16 %v617, %v616
        %v644 = vpack.c.bf16 %v619, %v618
        %v645 = vpack.c.bf16 %v621, %v620
        %v646 = vld [vmem:[%s4] sm:$0xff]
        %v647 = vld [vmem:[%s4 + $0x8] sm:$0xff]
        %v648 = vld [vmem:[%s4 + $0x10] sm:$0xff]
        %v649 = vld [vmem:[%s4 + $0x18] sm:$0xff]
        %v650 = vld [vmem:[%s4 + $0x20] sm:$0xff]
        %v651 = vld [vmem:[%s4 + $0x28] sm:$0xff]
        %v652 = vld [vmem:[%s4 + $0x30] sm:$0xff]
        %v653 = vld [vmem:[%s4 + $0x38] sm:$0xff]
        %v654 = vld [vmem:[%s4 + $0x40] sm:$0xff]
        %v655 = vld [vmem:[%s4 + $0x48] sm:$0xff]
        %v656 = vld [vmem:[%s4 + $0x50] sm:$0xff]
        %v657 = vld [vmem:[%s4 + $0x58] sm:$0xff]
        %v658 = vld [vmem:[%s4 + $0x60] sm:$0xff]
        %v659 = vld [vmem:[%s4 + $0x68] sm:$0xff]
        %v660 = vld [vmem:[%s4 + $0x70] sm:$0xff]
        %v661 = vld [vmem:[%s4 + $0x78] sm:$0xff]
        %663 = vset.pattern.permute.xlu0 0
        %664 = vperm.xlu0 %663, %v646
        %v665 = vpop.permute.xlu0 %664
        %668 = vset.pattern.permute.xlu0 0
        %669 = vperm.xlu0 %668, %v647
        %v670 = vpop.permute.xlu0 %669
        %673 = vset.pattern.permute.xlu0 0
        %674 = vperm.xlu0 %673, %v648
        %v675 = vpop.permute.xlu0 %674
        %678 = vset.pattern.permute.xlu0 0
        %679 = vperm.xlu0 %678, %v649
        %v680 = vpop.permute.xlu0 %679
        %683 = vset.pattern.permute.xlu0 0
        %684 = vperm.xlu0 %683, %v650
        %v685 = vpop.permute.xlu0 %684
        %688 = vset.pattern.permute.xlu0 0
        %689 = vperm.xlu0 %688, %v651
        %v690 = vpop.permute.xlu0 %689
        %693 = vset.pattern.permute.xlu0 0
        %694 = vperm.xlu0 %693, %v652
        %v695 = vpop.permute.xlu0 %694
        %698 = vset.pattern.permute.xlu0 0
        %699 = vperm.xlu0 %698, %v653
        %v700 = vpop.permute.xlu0 %699
        %703 = vset.pattern.permute.xlu0 0
        %704 = vperm.xlu0 %703, %v654
        %v705 = vpop.permute.xlu0 %704
        %708 = vset.pattern.permute.xlu0 0
        %709 = vperm.xlu0 %708, %v655
        %v710 = vpop.permute.xlu0 %709
        %713 = vset.pattern.permute.xlu0 0
        %714 = vperm.xlu0 %713, %v656
        %v715 = vpop.permute.xlu0 %714
        %718 = vset.pattern.permute.xlu0 0
        %719 = vperm.xlu0 %718, %v657
        %v720 = vpop.permute.xlu0 %719
        %723 = vset.pattern.permute.xlu0 0
        %724 = vperm.xlu0 %723, %v658
        %v725 = vpop.permute.xlu0 %724
        %728 = vset.pattern.permute.xlu0 0
        %729 = vperm.xlu0 %728, %v659
        %v730 = vpop.permute.xlu0 %729
        %733 = vset.pattern.permute.xlu0 0
        %734 = vperm.xlu0 %733, %v660
        %v735 = vpop.permute.xlu0 %734
        %738 = vset.pattern.permute.xlu0 0
        %739 = vperm.xlu0 %738, %v661
        %v740 = vpop.permute.xlu0 %739
        %v758 = vunpack.c.l.b16 %v622
        %v759 = vunpack.c.l.b16 %v623
        %v760 = vunpack.c.l.b16 %v624
        %v761 = vunpack.c.l.b16 %v625
        %v762 = vunpack.c.l.b16 %v626
        %v763 = vunpack.c.l.b16 %v627
        %v764 = vunpack.c.l.b16 %v628
        %v765 = vunpack.c.l.b16 %v629
        %v766 = vunpack.c.l.b16 %v630
        %v767 = vunpack.c.l.b16 %v631
        %v768 = vunpack.c.l.b16 %v632
        %v769 = vunpack.c.l.b16 %v633
        %v770 = vunpack.c.l.b16 %v634
        %v771 = vunpack.c.l.b16 %v635
        %v772 = vunpack.c.l.b16 %v636
        %v773 = vunpack.c.l.b16 %v637
        %v774 = vpack.c.b16 %v759, %v758
        %v775 = vpack.c.b16 %v761, %v760
        %v776 = vpack.c.b16 %v763, %v762
        %v777 = vpack.c.b16 %v765, %v764
        %v778 = vpack.c.b16 %v767, %v766
        %v779 = vpack.c.b16 %v769, %v768
        %v780 = vpack.c.b16 %v771, %v770
        %v781 = vpack.c.b16 %v773, %v772
        %790 = vmatprep.subr.bf16.mxu0 0
        %791 = vmatpush1.bf16.msra.mxu0 %v638
        %792 = vmatprep.subr.bf16.mxu0 0
        %793 = vmatpush1.bf16.msra.mxu0 %v639
        %794 = vmatprep.subr.bf16.mxu0 0
        %795 = vmatpush1.bf16.msra.mxu0 %v640
        %796 = vmatprep.subr.bf16.mxu0 0
        %797 = vmatpush1.bf16.msra.mxu0 %v641
        %798 = vmatprep.subr.bf16.mxu0 0
        %799 = vmatpush1.bf16.msra.mxu0 %v642
        %800 = vmatprep.subr.bf16.mxu0 0
        %801 = vmatpush1.bf16.msra.mxu0 %v643
        %802 = vmatprep.subr.bf16.mxu0 0
        %803 = vmatpush1.bf16.msra.mxu0 %v644
        %804 = vmatprep.subr.bf16.mxu0 0
        %805 = vmatpush1.bf16.msra.mxu0 %v645
        %806 = vmatprep.subr.bf16.mxu0 0
        %807 = vmatpush1.bf16.msra.mxu0 0
        %808 = vmatprep.subr.bf16.mxu0 0
        %809 = vmatpush1.bf16.msra.mxu0 0
        %810 = vmatprep.subr.bf16.mxu0 0
        %811 = vmatpush1.bf16.msra.mxu0 0
        %812 = vmatprep.subr.bf16.mxu0 0
        %813 = vmatpush1.bf16.msra.mxu0 0
        %814 = vmatprep.subr.bf16.mxu0 0
        %815 = vmatpush1.bf16.msra.mxu0 0
        %816 = vmatprep.subr.bf16.mxu0 0
        %817 = vmatpush1.bf16.msra.mxu0 0
        %818 = vmatprep.subr.bf16.mxu0 0
        %819 = vmatpush1.bf16.msra.mxu0 0
        %820 = vmatprep.subr.bf16.mxu0 0
        %821 = vmatpush1.bf16.msra.mxu0 0
        %822 = vmatprep.mubr.bf16.mxu0 0
        %823 = vmatmul.mubr.bf16.gmra.mrb[0].mxu0 %v774
        %v824 = vpop.f32.mrb[0].mxu0
        %v825 = vadd.f32 %v665, %v824
        %v826 = vpop.f32.mrb[0].mxu0
        %v827 = vpop.f32.mrb[0].mxu0
        %v828 = vadd.f32 %v670, %v827
        %v829 = vpop.f32.mrb[0].mxu0
        %830 = vmatprep.mubr.bf16.mxu0 0
        %831 = vmatmul.mubr.bf16.gmra.mrb[0].mxu0 %v775
        %v832 = vpop.f32.mrb[0].mxu0
        %v833 = vadd.f32 %v675, %v832
        %v834 = vpop.f32.mrb[0].mxu0
        %v835 = vpop.f32.mrb[0].mxu0
        %v836 = vadd.f32 %v680, %v835
        %v837 = vpop.f32.mrb[0].mxu0
        %838 = vmatprep.mubr.bf16.mxu0 0
        %839 = vmatmul.mubr.bf16.gmra.mrb[0].mxu0 %v776
        %v840 = vpop.f32.mrb[0].mxu0
        %v841 = vadd.f32 %v685, %v840
        %v842 = vpop.f32.mrb[0].mxu0
        %v843 = vpop.f32.mrb[0].mxu0
        %v844 = vadd.f32 %v690, %v843
        %v845 = vpop.f32.mrb[0].mxu0
        %846 = vmatprep.mubr.bf16.mxu0 0
        %847 = vmatmul.mubr.bf16.gmra.mrb[0].mxu0 %v777
        %v848 = vpop.f32.mrb[0].mxu0
        %v849 = vadd.f32 %v695, %v848
        %v850 = vpop.f32.mrb[0].mxu0
        %v851 = vpop.f32.mrb[0].mxu0
        %v852 = vadd.f32 %v700, %v851
        %v853 = vpop.f32.mrb[0].mxu0
        %854 = vmatprep.mubr.bf16.mxu0 0
        %855 = vmatmul.mubr.bf16.gmra.mrb[0].mxu0 %v778
        %v856 = vpop.f32.mrb[0].mxu0
        %v857 = vadd.f32 %v705, %v856
        %v858 = vpop.f32.mrb[0].mxu0
        %v859 = vpop.f32.mrb[0].mxu0
        %v860 = vadd.f32 %v710, %v859
        %v861 = vpop.f32.mrb[0].mxu0
        %862 = vmatprep.mubr.bf16.mxu0 0
        %863 = vmatmul.mubr.bf16.gmra.mrb[0].mxu0 %v779
        %v864 = vpop.f32.mrb[0].mxu0
        %v865 = vadd.f32 %v715, %v864
        %v866 = vpop.f32.mrb[0].mxu0
        %v867 = vpop.f32.mrb[0].mxu0
        %v868 = vadd.f32 %v720, %v867
        %v869 = vpop.f32.mrb[0].mxu0
        %870 = vmatprep.mubr.bf16.mxu0 0
        %871 = vmatmul.mubr.bf16.gmra.mrb[0].mxu0 %v780
        %v872 = vpop.f32.mrb[0].mxu0
        %v873 = vadd.f32 %v725, %v872
        %v874 = vpop.f32.mrb[0].mxu0
        %v875 = vpop.f32.mrb[0].mxu0
        %v876 = vadd.f32 %v730, %v875
        %v877 = vpop.f32.mrb[0].mxu0
        %878 = vmatprep.mubr.bf16.mxu0 0
        %879 = vmatmul.mubr.bf16.gmra.mrb[0].mxu0 %v781
        %v880 = vpop.f32.mrb[0].mxu0
        %v881 = vadd.f32 %v735, %v880
        %v882 = vpop.f32.mrb[0].mxu0
        %v883 = vpop.f32.mrb[0].mxu0
        %v884 = vadd.f32 %v740, %v883
        %v885 = vpop.f32.mrb[0].mxu0
        %886 = vdwg.mxu0
        %v887 = vmax.f32 %v825, 0.0
        %v888 = vmax.f32 %v828, 0.0
        %v889 = vmax.f32 %v833, 0.0
        %v890 = vmax.f32 %v836, 0.0
        %v891 = vmax.f32 %v841, 0.0
        %v892 = vmax.f32 %v844, 0.0
        %v893 = vmax.f32 %v849, 0.0
        %v894 = vmax.f32 %v852, 0.0
        %v895 = vmax.f32 %v857, 0.0
        %v896 = vmax.f32 %v860, 0.0
        %v897 = vmax.f32 %v865, 0.0
        %v898 = vmax.f32 %v868, 0.0
        %v899 = vmax.f32 %v873, 0.0
        %v900 = vmax.f32 %v876, 0.0
        %v901 = vmax.f32 %v881, 0.0
        %v902 = vmax.f32 %v884, 0.0
        %v903 = vld [vmem:[%s5] sm:$0x1]
        %v904 = vpack.c.bf16 %v888, %v887
        %v905 = vpack.c.bf16 %v890, %v889
        %v906 = vpack.c.bf16 %v892, %v891
        %v907 = vpack.c.bf16 %v894, %v893
        %v908 = vpack.c.bf16 %v896, %v895
        %v909 = vpack.c.bf16 %v898, %v897
        %v910 = vpack.c.bf16 %v900, %v899
        %v911 = vpack.c.bf16 %v902, %v901
        %v912 = vld [vmem:[#allocation2] sm:$0x1]
        %914 = vset.pattern.permute.xlu0 0
        %915 = vperm.xlu0 %914, %v912
        %v916 = vpop.permute.xlu0 %915
        %v918 = vlaneseq
        %v919 = vshrl.u32 %v918, 7
        %v920 = vsub.s32 0, %v919
        %v921 = vrot.slane %v916, %v920
        %922 = vmatprep.subr.bf16.mxu0 0
        %923 = vmatpush1.bf16.msra.mxu0 %v904
        %924 = vmatprep.subr.bf16.mxu0 0
        %925 = vmatpush1.bf16.msra.mxu0 %v905
        %926 = vmatprep.subr.bf16.mxu0 0
        %927 = vmatpush1.bf16.msra.mxu0 %v906
        %928 = vmatprep.subr.bf16.mxu0 0
        %929 = vmatpush1.bf16.msra.mxu0 %v907
        %930 = vmatprep.subr.bf16.mxu0 0
        %931 = vmatpush1.bf16.msra.mxu0 %v908
        %932 = vmatprep.subr.bf16.mxu0 0
        %933 = vmatpush1.bf16.msra.mxu0 %v909
        %934 = vmatprep.subr.bf16.mxu0 0
        %935 = vmatpush1.bf16.msra.mxu0 %v910
        %936 = vmatprep.subr.bf16.mxu0 0
        %937 = vmatpush1.bf16.msra.mxu0 %v911
        %938 = vmatprep.subr.bf16.mxu0 0
        %939 = vmatpush1.bf16.msra.mxu0 0
        %940 = vmatprep.subr.bf16.mxu0 0
        %941 = vmatpush1.bf16.msra.mxu0 0
        %942 = vmatprep.subr.bf16.mxu0 0
        %943 = vmatpush1.bf16.msra.mxu0 0
        %944 = vmatprep.subr.bf16.mxu0 0
        %945 = vmatpush1.bf16.msra.mxu0 0
        %946 = vmatprep.subr.bf16.mxu0 0
        %947 = vmatpush1.bf16.msra.mxu0 0
        %948 = vmatprep.subr.bf16.mxu0 0
        %949 = vmatpush1.bf16.msra.mxu0 0
        %950 = vmatprep.subr.bf16.mxu0 0
        %951 = vmatpush1.bf16.msra.mxu0 0
        %952 = vmatprep.subr.bf16.mxu0 0
        %953 = vmatpush1.bf16.msra.mxu0 0
        %954 = vmatprep.mubr.bf16.mxu0 0
        %955 = vmatmul.mubr.bf16.gmra.mrb[0].mxu0 %v903
        %v956 = vpop.f32.mrb[0].mxu0
        %v957 = vadd.f32 %v921, %v956
        %v958 = vpop.f32.mrb[0].mxu0
        %v959 = vpop.f32.mrb[0].mxu0
        %v960 = vpop.f32.mrb[0].mxu0
        %961 = vdwg.mxu0
        %962 = vst [vmem:[%s322] sm:$0x1] %v957
        %s963 = sand.u32 %s183, 1
        %s964 = scalar_lea.sflag [#allocation5], %s963
        %s965 = sand.u32 %s183, 1
        %s966 = scalar_lea.vmem [#allocation4], %s965
        // Predicated region
        $region90: #{tpu_custom_call.1} parent=84 // pred_check
          %p967 = pneg %p193
        $region91: #{tpu_custom_call.1} parent=84 // pred_check_branch
          %969 = sbr.rel (%p967) target = $region93
        $region92: #{tpu_custom_call.1} parent=84 // pred_region
          %s971 = ssub.s32 16, 16
          %972 = vsyncadd %s964, %s971
          %s973 = smul.addr %s23, 16
          %s974 = scalar_lea.hbm %s7, %s973
          %s976 = sshll.u32 %s966, 4
          %s977 = int_to_ptr.vmem [resolvable:$true] %s976
          %979 = dma.vmem_to_hbm [thread:$0]  %s977, 16, %s974, %s964
        $region93: #{tpu_custom_call.1} parent=84 // pred_fallthru
          _
      $region85: #{tpu_custom_call.1} parent=5 // pred_fallthru
        _
      %p980 = scmp.le.s32.totalorder 2, %s18
      // Predicated region
      $region94: #{tpu_custom_call.1} parent=5 // pred_check
        %p981 = pneg %p980
      $region95: #{tpu_custom_call.1} parent=5 // pred_check_branch
        %983 = sbr.rel (%p981) target = $region97
      $region96: #{tpu_custom_call.1} parent=5 // pred_region
        %s984 = ssub.s32 %s18, 2
        // Predicated region
        $region98: #{tpu_custom_call.1} parent=96 // pred_check
          %p985 = pneg %p199
        $region99: #{tpu_custom_call.1} parent=96 // pred_check_branch
          %987 = sbr.rel (%p985) target = $region101
        $region100: #{tpu_custom_call.1} parent=96 // pred_region
          %s988 = sand.u32 %s184, 1
          %s989 = scalar_lea.sflag [#allocation5], %s988
          %s990 = sand.u32 %s184, 1
          %s991 = scalar_lea.vmem [#allocation4], %s990
          %992 = dma.done %s989, 16
        $region101: #{tpu_custom_call.1} parent=96 // pred_fallthru
          _
      $region97: #{tpu_custom_call.1} parent=5 // pred_fallthru
        _
    $region6: #{tpu_custom_call.1} parent=1 // loop_footer
      %s22 = sadd.s32 1, %s18
    $region7: #{tpu_custom_call.1} parent=1 // loop_footer_branch
      %17 = sbr.rel target = $region3
    $region8: #{tpu_custom_call.1} parent=1 // loop_exit
      _
    %993 = vsyncpa [#allocation5], 1
    %s994 = scalar_lea.sflag [#allocation5], 1
    %995 = vsyncpa %s994, 1

</llo_original>
